<compile_context>
chip_gen: v7x
topology: tpu7x:2x2x1
jax: 0.10.0
libtpu: 0.0.40
codegen_flags: <defaults>
</compile_context>

<pallas_src>
import jax
import jax.numpy as jnp
from jax.experimental import pallas as pl
from jax.experimental.pallas import tpu as pltpu


def _qattention_kernel(mea_r_ref, mea_i_ref, mea_w_ref,
                       rho_r_ref, rho_i_ref, out_ref):
    f32 = jnp.float32
    mr = mea_r_ref[...].astype(f32)      # (Bb, T, E)
    mi = mea_i_ref[...].astype(f32)      # (Bb, T, E)
    w = mea_w_ref[...].astype(f32)       # (Bb, T, 1)
    rr = rho_r_ref[0].astype(f32)        # (Bb, E, E)
    ri = rho_i_ref[0].astype(f32)        # (Bb, E, E)

    t = mr.shape[1]

    # --- fused complex measurement ------------------------------------------
    # Stack real/imag along the time (sublane) axis: two batched matmuls with
    # 2T-row LHS instead of four T-row ones.
    #   ar = mr@rr - mi@ri ,  ai = mr@ri + mi@rr
    p = jnp.concatenate([mr, mi], axis=1)                          # (Bb, 2T, E)
    pr = jnp.einsum('bte,bef->btf', p, rr, preferred_element_type=f32)
    pi = jnp.einsum('bte,bef->btf', p, ri, preferred_element_type=f32)
    ar = pr[:, :t, :] - pi[:, t:, :]
    ai = pi[:, :t, :] + pr[:, t:, :]

    # per-timestamp probability:  <res, m>  (real part of complex inner prod)
    probs = jnp.sum(ar * mr + ai * mi, axis=-1, keepdims=True)     # (Bb, T, 1)

    # --- weights = softmax(probs * mea_weights) over the T axis --------------
    logits = probs * w
    logits = logits - jnp.max(logits, axis=1, keepdims=True)
    e = jnp.exp(logits)
    denom = jnp.sum(e, axis=1, keepdims=True)
    wts = e * pl.reciprocal(denom, approx=True)                    # (Bb, T, 1)

    # --- out = sum_t wts[t] * (outer(mr_t, mr_t) + outer(mi_t, mi_t)) --------
    # Real/imag again fused into one (Bb, 2T, E) x (Bb, 2T, E) contraction
    # over the stacked 2T axis.
    wp = jnp.concatenate([mr * wts, mi * wts], axis=1)             # (Bb, 2T, E)
    out = jnp.einsum('bte,btf->bef', wp, p, preferred_element_type=f32)
    out_ref[0] = out.astype(out_ref.dtype)


def _pick_b_blk(batch, t, e, itemsize, budget_bytes=8 << 20):
    """Largest divisor of `batch` whose double-buffered working set fits a
    conservative VMEM budget (safe for v5e's 16 MiB default scoped VMEM and
    v7x's 64 MiB total)."""
    for cand in range(batch, 0, -1):
        if batch % cand:
            continue
        per_step = itemsize * cand * (2 * t * e + t + 3 * e * e)
        if 2 * per_step <= budget_bytes:
            return cand
    return 1


def qattention(in_states, mea_states, mea_weights, *, b_blk=None):
    """Pallas equivalent of QAttention.forward.

    in_states:   list of [s_r, s_i] pairs, each (B, E, E)
                 -- OR pre-stacked (rho_r, rho_i), each (S, B, E, E),
                    which avoids the extra host-side stacking copy.
    mea_states:  [mea_r, mea_i], each (B, T, E)
    mea_weights: (B, T, 1)
    returns:     list of [out_r, out_i], each (B, E, E)
    """
    mea_r, mea_i = mea_states
    B, T, E = mea_r.shape

    if len(in_states) == 2 and getattr(in_states[0], "ndim", None) == 4:
        rho_r, rho_i = in_states                         # already (S, B, E, E)
    else:
        rho_r = jnp.stack([s[0] for s in in_states], axis=0)   # (S, B, E, E)
        rho_i = jnp.stack([s[1] for s in in_states], axis=0)   # (S, B, E, E)
    S = rho_r.shape[0]

    if b_blk is None:
        b_blk = _pick_b_blk(B, T, E, jnp.dtype(mea_r.dtype).itemsize)
    assert B % b_blk == 0, "b_blk must divide the batch size"
    nb = B // b_blk

    out = pl.pallas_call(
        _qattention_kernel,
        out_shape=jax.ShapeDtypeStruct((S, B, E, E), mea_r.dtype),
        grid_spec=pltpu.PrefetchScalarGridSpec(
            num_scalar_prefetch=0,
            # s is the innermost grid axis: mea_* block indices are constant
            # across consecutive steps -> their DMA is skipped (reuse across S).
            grid=(nb, S),
            in_specs=[
                pl.BlockSpec((b_blk, T, E), lambda b, s: (b, 0, 0)),        # mea_r
                pl.BlockSpec((b_blk, T, E), lambda b, s: (b, 0, 0)),        # mea_i
                pl.BlockSpec((b_blk, T, 1), lambda b, s: (b, 0, 0)),        # mea_weights
                pl.BlockSpec((1, b_blk, E, E), lambda b, s: (s, b, 0, 0)),  # rho_r
                pl.BlockSpec((1, b_blk, E, E), lambda b, s: (s, b, 0, 0)),  # rho_i
            ],
            out_specs=pl.BlockSpec((1, b_blk, E, E), lambda b, s: (s, b, 0, 0)),
        ),
        compiler_params=pltpu.CompilerParams(
            dimension_semantics=("parallel", "arbitrary")),
    )(mea_r, mea_i, mea_weights, rho_r, rho_i)

    # out_i is bit-identical to out_r in the reference module -> alias it.
    return [[out[s], out[s]] for s in range(S)]


def qattention_ref(in_states, mea_states, mea_weights):
    """Pure-JAX reference mirroring the PyTorch module exactly."""
    mea_r, mea_i = mea_states
    mea_mat = (jnp.einsum('bte,btf->btef', mea_r, mea_r)
               + jnp.einsum('bte,btf->btef', mea_i, mea_i))
    outs = []
    for s_r, s_i in in_states:
        ar = (jnp.einsum('bte,bef->btf', mea_r, s_r)
              - jnp.einsum('bte,bef->btf', mea_i, s_i))
        ai = (jnp.einsum('bte,bef->btf', mea_r, s_i)
              + jnp.einsum('bte,bef->btf', mea_i, s_r))
        probs = jnp.sum(ar * mea_r + ai * mea_i, axis=-1)          # (B, T)
        w = jax.nn.softmax(probs * mea_weights[..., 0], axis=-1)
        o = jnp.sum(mea_mat * w[..., None, None], axis=1)          # (B, E, E)
        outs.append([o, o])
    return outs


if __name__ == "__main__":
    key = jax.random.PRNGKey(0)
    B, T, E, S = 2, 8, 32, 2
    ks = jax.random.split(key, 3 + 2 * S)

    mea_r = jax.random.normal(ks[0], (B, T, E), jnp.float32)
    mea_i = jax.random.normal(ks[1], (B, T, E), jnp.float32)
    mea_w = jax.random.normal(ks[2], (B, T, 1), jnp.float32)

    in_states = []
    for s in range(S):
        s_r = 0.1 * jax.random.normal(ks[3 + 2 * s], (B, E, E), jnp.float32)
        s_i = 0.1 * jax.random.normal(ks[4 + 2 * s], (B, E, E), jnp.float32)
        in_states.append([s_r, s_i])

    out = qattention(in_states, [mea_r, mea_i], mea_w)
    jax.block_until_ready(out)

    ref = qattention_ref(in_states, [mea_r, mea_i], mea_w)
    for (o_r, o_i), (r_r, r_i) in zip(out, ref):
        # tolerance accounts for the EUP approximate reciprocal in the softmax
        assert jnp.allclose(o_r, r_r, atol=2e-3, rtol=2e-3)
        assert jnp.allclose(o_i, r_i, atol=2e-3, rtol=2e-3)

    print("KERNEL_OK")
</pallas_src>

<mosaic_0001>
module attributes {stable_mosaic.version = 11 : i64} {
  func.func @_qattention_kernel(%arg0: i32, %arg1: i32, %arg2: memref<2x8x32xf32, #tpu.memory_space<vmem>>, %arg3: memref<2x8x32xf32, #tpu.memory_space<vmem>>, %arg4: memref<2x8x1xf32, #tpu.memory_space<vmem>>, %arg5: memref<1x2x32x32xf32, #tpu.memory_space<vmem>>, %arg6: memref<1x2x32x32xf32, #tpu.memory_space<vmem>>, %arg7: memref<1x2x32x32xf32, #tpu.memory_space<vmem>>) attributes {dimension_semantics = [#tpu.dimension_semantics<parallel>, #tpu.dimension_semantics<arbitrary>], iteration_bounds = array<i64: 1, 2>, scalar_prefetch = 0 : i64, scratch_operands = 0 : i64, tpu.core_type = #tpu.core_type<tc>, window_params = [{transform_indices = @transform_0, window_bounds = array<i64: 2, 8, 32>}, {transform_indices = @transform_1, window_bounds = array<i64: 2, 8, 32>}, {transform_indices = @transform_2, window_bounds = array<i64: 2, 8, 1>}, {transform_indices = @transform_3, window_bounds = array<i64: 1, 2, 32, 32>}, {transform_indices = @transform_4, window_bounds = array<i64: 1, 2, 32, 32>}, {transform_indices = @transform_5, window_bounds = array<i64: 1, 2, 32, 32>}]} {
    %c0 = arith.constant 0 : index
    %c0_0 = arith.constant 0 : index
    %c0_1 = arith.constant 0 : index
    %0 = vector.load %arg2[%c0, %c0_0, %c0_1] : memref<2x8x32xf32, #tpu.memory_space<vmem>>, vector<2x8x32xf32>
    %c0_2 = arith.constant 0 : index
    %c0_3 = arith.constant 0 : index
    %c0_4 = arith.constant 0 : index
    %1 = vector.load %arg3[%c0_2, %c0_3, %c0_4] : memref<2x8x32xf32, #tpu.memory_space<vmem>>, vector<2x8x32xf32>
    %c0_5 = arith.constant 0 : index
    %c0_6 = arith.constant 0 : index
    %c0_7 = arith.constant 0 : index
    %2 = vector.load %arg4[%c0_5, %c0_6, %c0_7] : memref<2x8x1xf32, #tpu.memory_space<vmem>>, vector<2x8x1xf32>
    %c0_8 = arith.constant 0 : index
    %c0_9 = arith.constant 0 : index
    %c0_10 = arith.constant 0 : index
    %c0_11 = arith.constant 0 : index
    %3 = vector.load %arg5[%c0_8, %c0_9, %c0_10, %c0_11] : memref<1x2x32x32xf32, #tpu.memory_space<vmem>>, vector<1x2x32x32xf32>
    %4 = vector.shape_cast %3 : vector<1x2x32x32xf32> to vector<2x32x32xf32>
    %c0_12 = arith.constant 0 : index
    %c0_13 = arith.constant 0 : index
    %c0_14 = arith.constant 0 : index
    %c0_15 = arith.constant 0 : index
    %5 = vector.load %arg6[%c0_12, %c0_13, %c0_14, %c0_15] : memref<1x2x32x32xf32, #tpu.memory_space<vmem>>, vector<1x2x32x32xf32>
    %6 = vector.shape_cast %5 : vector<1x2x32x32xf32> to vector<2x32x32xf32>
    %7 = tpu.concatenate %0, %1 in 1 : vector<2x8x32xf32>, vector<2x8x32xf32> -> vector<2x16x32xf32>
    "tpu.trace_start"() <{level = 10 : i32, message = "bte,bef->btf"}> : () -> ()
    %cst = arith.constant dense<0.000000e+00> : vector<2x16x32xf32>
    %8 = tpu.matmul %7, %4, %cst {dimension_numbers = #tpu.dot_dimension_numbers<[2], [1], [1], [2], [0, 0, 0, 1, 1, 2], [0], [0]>} : vector<2x16x32xf32>, vector<2x32x32xf32>, vector<2x16x32xf32> -> vector<2x16x32xf32>
    %cst_16 = arith.constant dense<0.000000e+00> : vector<2x16x32xf32>
    %9 = tpu.matmul %7, %6, %cst_16 {dimension_numbers = #tpu.dot_dimension_numbers<[2], [1], [1], [2], [0, 0, 0, 1, 1, 2], [0], [0]>} : vector<2x16x32xf32>, vector<2x32x32xf32>, vector<2x16x32xf32> -> vector<2x16x32xf32>
    "tpu.trace_stop"() : () -> ()
    %10 = vector.extract_strided_slice %8 {offsets = [0, 0, 0], sizes = [2, 8, 32], strides = [1, 1, 1]} : vector<2x16x32xf32> to vector<2x8x32xf32>
    %11 = vector.extract_strided_slice %9 {offsets = [0, 8, 0], sizes = [2, 8, 32], strides = [1, 1, 1]} : vector<2x16x32xf32> to vector<2x8x32xf32>
    %12 = arith.subf %10, %11 : vector<2x8x32xf32>
    %13 = vector.extract_strided_slice %9 {offsets = [0, 0, 0], sizes = [2, 8, 32], strides = [1, 1, 1]} : vector<2x16x32xf32> to vector<2x8x32xf32>
    %14 = vector.extract_strided_slice %8 {offsets = [0, 8, 0], sizes = [2, 8, 32], strides = [1, 1, 1]} : vector<2x16x32xf32> to vector<2x8x32xf32>
    %15 = arith.addf %13, %14 : vector<2x8x32xf32>
    %16 = arith.mulf %12, %0 : vector<2x8x32xf32>
    %17 = arith.mulf %15, %1 : vector<2x8x32xf32>
    %18 = arith.addf %16, %17 : vector<2x8x32xf32>
    %cst_17 = arith.constant dense<0.000000e+00> : vector<2x8xf32>
    %19 = vector.multi_reduction <add>, %18, %cst_17 [2] : vector<2x8x32xf32> to vector<2x8xf32>
    %20 = vector.shape_cast %19 : vector<2x8xf32> to vector<2x8x1xf32>
    %21 = arith.mulf %20, %2 : vector<2x8x1xf32>
    %cst_18 = arith.constant dense<0xFF800000> : vector<2x1xf32>
    %22 = vector.multi_reduction <maximumf>, %21, %cst_18 [1] : vector<2x8x1xf32> to vector<2x1xf32>
    %23 = vector.shape_cast %22 : vector<2x1xf32> to vector<2x1x1xf32>
    %24 = vector.broadcast %23 : vector<2x1x1xf32> to vector<2x8x1xf32>
    %25 = arith.subf %21, %24 : vector<2x8x1xf32>
    %26 = math.exp %25 : vector<2x8x1xf32>
    %cst_19 = arith.constant dense<0.000000e+00> : vector<2x1xf32>
    %27 = vector.multi_reduction <add>, %26, %cst_19 [1] : vector<2x8x1xf32> to vector<2x1xf32>
    %28 = vector.shape_cast %27 : vector<2x1xf32> to vector<2x1x1xf32>
    %29 = tpu.reciprocal %28 {approx = true} : vector<2x1x1xf32> -> vector<2x1x1xf32>
    %30 = vector.broadcast %29 : vector<2x1x1xf32> to vector<2x8x1xf32>
    %31 = arith.mulf %26, %30 : vector<2x8x1xf32>
    %32 = vector.broadcast %31 : vector<2x8x1xf32> to vector<2x8x32xf32>
    %33 = arith.mulf %0, %32 : vector<2x8x32xf32>
    %34 = vector.broadcast %31 : vector<2x8x1xf32> to vector<2x8x32xf32>
    %35 = arith.mulf %1, %34 : vector<2x8x32xf32>
    %36 = tpu.concatenate %33, %35 in 1 : vector<2x8x32xf32>, vector<2x8x32xf32> -> vector<2x16x32xf32>
    "tpu.trace_start"() <{level = 10 : i32, message = "bte,btf->bef"}> : () -> ()
    %cst_20 = arith.constant dense<0.000000e+00> : vector<2x32x32xf32>
    %37 = tpu.matmul %36, %7, %cst_20 {dimension_numbers = #tpu.dot_dimension_numbers<[1], [1], [2], [2], [0, 0, 0, 2, 1, 2], [0], [0]>} : vector<2x16x32xf32>, vector<2x16x32xf32>, vector<2x32x32xf32> -> vector<2x32x32xf32>
    "tpu.trace_stop"() : () -> ()
    %c0_21 = arith.constant 0 : index
    %c0_22 = arith.constant 0 : index
    %c0_23 = arith.constant 0 : index
    %c0_24 = arith.constant 0 : index
    %38 = vector.load %arg7[%c0_21, %c0_22, %c0_23, %c0_24] : memref<1x2x32x32xf32, #tpu.memory_space<vmem>>, vector<1x2x32x32xf32>
    %39 = vector.shape_cast %38 : vector<1x2x32x32xf32> to vector<2x32x32xf32>
    %40 = vector.shape_cast %37 : vector<2x32x32xf32> to vector<1x2x32x32xf32>
    tpu.vector_store %arg7[%c0_21, %c0_22, %c0_23, %c0_24], %40 {strides = array<i32>} : memref<1x2x32x32xf32, #tpu.memory_space<vmem>>, vector<1x2x32x32xf32>,
    return
  }
  func.func @transform_0(%arg0: i32, %arg1: i32) -> (i32, i32, i32) {
    %c0_i32 = arith.constant 0 : i32
    %c0_i32_0 = arith.constant 0 : i32
    %c0_i32_1 = arith.constant 0 : i32
    return %arg0, %c0_i32, %c0_i32_0 : i32, i32, i32
  }
  func.func @transform_1(%arg0: i32, %arg1: i32) -> (i32, i32, i32) {
    %c0_i32 = arith.constant 0 : i32
    %c0_i32_0 = arith.constant 0 : i32
    %c0_i32_1 = arith.constant 0 : i32
    return %arg0, %c0_i32, %c0_i32_0 : i32, i32, i32
  }
  func.func @transform_2(%arg0: i32, %arg1: i32) -> (i32, i32, i32) {
    %c0_i32 = arith.constant 0 : i32
    %c0_i32_0 = arith.constant 0 : i32
    %c0_i32_1 = arith.constant 0 : i32
    return %arg0, %c0_i32, %c0_i32_0 : i32, i32, i32
  }
  func.func @transform_3(%arg0: i32, %arg1: i32) -> (i32, i32, i32, i32) {
    %c0_i32 = arith.constant 0 : i32
    %c0_i32_0 = arith.constant 0 : i32
    %c0_i32_1 = arith.constant 0 : i32
    return %arg1, %arg0, %c0_i32, %c0_i32_0 : i32, i32, i32, i32
  }
  func.func @transform_4(%arg0: i32, %arg1: i32) -> (i32, i32, i32, i32) {
    %c0_i32 = arith.constant 0 : i32
    %c0_i32_0 = arith.constant 0 : i32
    %c0_i32_1 = arith.constant 0 : i32
    return %arg1, %arg0, %c0_i32, %c0_i32_0 : i32, i32, i32, i32
  }
  func.func @transform_5(%arg0: i32, %arg1: i32) -> (i32, i32, i32, i32) {
    %c0_i32 = arith.constant 0 : i32
    %c0_i32_0 = arith.constant 0 : i32
    %c0_i32_1 = arith.constant 0 : i32
    return %arg1, %arg0, %c0_i32, %c0_i32_0 : i32, i32, i32, i32
  }
}

</mosaic_0001>

<llo_original>
// kernel: tpu_custom_call.1
$region0: #{tpu_custom_call.1}
  #allocation0 [shape = 'u32[]', space=smem, size = 0x4, offset = 0x4, fixed_abs, tag = 'smem constant byte address 0x4 - core index']
  #allocation1 [shape = 'u32[144,128]{1,0:T(1,128)}', space=vmem, size = 0x12000, scoped, tag = 'internal scratch']
  %s0 = inlined_call_operand.vmem [shape: f32[2,8,32], index: 0, kind: input, shape index: {}]
  %s1 = inlined_call_operand.hbm [shape: f32[2,8,32], index: 1, kind: input, shape index: {}]
  %s2 = inlined_call_operand.vmem [shape: f32[2,8,1], index: 2, kind: input, shape index: {}]
  %s3 = inlined_call_operand.hbm [shape: f32[2,2,32,32], index: 3, kind: input, shape index: {}]
  %s4 = inlined_call_operand.hbm [shape: f32[2,2,32,32], index: 4, kind: input, shape index: {}]
  %s5 = inlined_call_operand.hbm [shape: f32[2,2,32,32], index: 5, kind: output, shape index: {}]
  %s6 = sld [smem:[#allocation0]]
  $region65: #{tpu_custom_call.1} parent=0
    _
  %s8 = ssub.s32 1, %s6
  %s9 = scalar_select 0, %s8, %s6
  $region1: #{tpu_custom_call.1} parent=0
    #allocation2 [shape = 'u8[8192]{0}', space=vmem, size = 0x2000, scoped, tag = 'input window, operand 1, single buffered']
    #allocation3 [shape = 's32[2]{0}', space=sflag, size = 0x8, scoped, tag = 'scoped memory for tpu_custom_call.1']
    #allocation4 [shape = 's32[2]{0}', space=sflag, size = 0x8, scoped, tag = 'scoped memory for tpu_custom_call.1']
    #allocation5 [shape = 'u8[65536]{0}', space=vmem, size = 0x10000, scoped, tag = 'input window, operand 3']
    #allocation6 [shape = 's32[2]{0}', space=sflag, size = 0x8, scoped, tag = 'scoped memory for tpu_custom_call.1']
    #allocation7 [shape = 'u8[65536]{0}', space=vmem, size = 0x10000, scoped, tag = 'input window, operand 4']
    #allocation8 [shape = 'u8[65536]{0}', space=vmem, size = 0x10000, scoped, tag = 'output window, operand 0']
    %10 = vsyncpa [#allocation3], 0
    %11 = vsyncpa [#allocation6], 0
    %s12 = scalar_lea.sflag [#allocation6], 1
    %13 = vsyncpa %s12, 0
    %14 = vsyncpa [#allocation4], 0
    %s15 = scalar_lea.sflag [#allocation4], 1
    %16 = vsyncpa %s15, 0
    loop: start=0, step=1, limit=4
    $region2: #{tpu_custom_call.1} parent=1 // loop_pre_header
      _
    $region3: #{tpu_custom_call.1} parent=1 // loop_header
      %s18 = sphi 0, %s22
      %p19 = scmp.ge.s32.totalorder %s18, 4
      %s25 = sphi 0, %s37
      %s26 = sphi 0, %s33
      %s27 = sphi 0, %s25
      %s28 = sphi 0, %s26
      %s29 = sphi 0, %s27
      %s30 = sphi 0, %s28
      %s40 = sphi 0, %s42
      %s43 = sphi 0, %s40
      %s44 = sphi 0, %s43
      %s60 = sphi 0, %s44
      %s66 = sphi 0, %s68
      %s69 = sphi 0, %s66
      %s70 = sphi 0, %s69
      %s86 = sphi 0, %s70
      %s92 = sphi 0, %s94
      %s95 = sphi 0, %s92
      %s96 = sphi 0, %s95
      %s112 = sphi 0, %s96
      %s120 = sphi 0, %s122
      %s123 = sphi 0, %s120
      %s124 = sphi 0, %s123
      %s140 = sphi 0, %s124
      %s148 = sphi 0, %s150
      %s151 = sphi 0, %s148
      %s152 = sphi 0, %s151
      %s168 = sphi 0, %s152
      %s176 = sphi 0, %s178
      %s179 = sphi 0, %s176
      %s180 = sphi 0, %s179
      %s196 = sphi 0, %s180
    $region4: #{tpu_custom_call.1} parent=1 // loop_header_branch
      %21 = sbr.rel (%p19) target = $region8
    $region5: #{tpu_custom_call.1} parent=1 // loop_body
      %s23 = ssub.s32 %s18, 1
      %s24 = ssub.s32 %s18, 2
      %s31 = sadd.s32 1, %s26
      %p32 = scmp.ge.s32.totalorder %s31, 2
      %s33 = scalar_select %p32, 0, %s31
      %s34 = sadd.s32 1, %s25
      %s35 = scalar_select %p32, %s34, %s25
      %p36 = scmp.ge.s32.totalorder %s35, 1
      %s37 = scalar_select %p36, 0, %s35
      %s38 = ssub.s32 %s25, %s37
      %p39 = scmp.eq.s32.totalorder %s38, 0
      %s41 = sadd.s32 %s40, 1
      %s42 = scalar_select %p39, %s40, %s41
      %p45 = pneg %p39
      %p46 = scmp.eq.s32.totalorder %s18, 1
      %p47 = por %p45, %p46
      %p48 = scmp.ne.s32.totalorder %s40, %s43
      %p49 = scmp.eq.s32.totalorder %s18, 0
      %p50 = por %p48, %p49
      %p51 = scmp.ne.s32.totalorder %s40, %s43
      %p52 = scmp.eq.s32.totalorder %s23, 1
      %p53 = por %p51, %p52
      %p54 = scmp.ne.s32.totalorder %s43, %s44
      %p55 = scmp.eq.s32.totalorder %s23, 0
      %p56 = por %p54, %p55
      %p57 = scmp.ne.s32.totalorder %s43, %s44
      %p58 = scmp.eq.s32.totalorder %s24, 1
      %p59 = por %p57, %p58
      %p61 = scmp.ne.s32.totalorder %s44, %s60
      %p62 = scmp.eq.s32.totalorder %s24, 0
      %p63 = por %p61, %p62
      %s64 = ssub.s32 %s25, %s37
      %p65 = scmp.eq.s32.totalorder %s64, 0
      %s67 = sadd.s32 %s66, 1
      %s68 = scalar_select %p65, %s66, %s67
      %p71 = pneg %p65
      %p72 = scmp.eq.s32.totalorder %s18, 1
      %p73 = por %p71, %p72
      %p74 = scmp.ne.s32.totalorder %s66, %s69
      %p75 = scmp.eq.s32.totalorder %s18, 0
      %p76 = por %p74, %p75
      %p77 = scmp.ne.s32.totalorder %s66, %s69
      %p78 = scmp.eq.s32.totalorder %s23, 1
      %p79 = por %p77, %p78
      %p80 = scmp.ne.s32.totalorder %s69, %s70
      %p81 = scmp.eq.s32.totalorder %s23, 0
      %p82 = por %p80, %p81
      %p83 = scmp.ne.s32.totalorder %s69, %s70
      %p84 = scmp.eq.s32.totalorder %s24, 1
      %p85 = por %p83, %p84
      %p87 = scmp.ne.s32.totalorder %s70, %s86
      %p88 = scmp.eq.s32.totalorder %s24, 0
      %p89 = por %p87, %p88
      %s90 = ssub.s32 %s25, %s37
      %p91 = scmp.eq.s32.totalorder %s90, 0
      %s93 = sadd.s32 %s92, 1
      %s94 = scalar_select %p91, %s92, %s93
      %p97 = pneg %p91
      %p98 = scmp.eq.s32.totalorder %s18, 1
      %p99 = por %p97, %p98
      %p100 = scmp.ne.s32.totalorder %s92, %s95
      %p101 = scmp.eq.s32.totalorder %s18, 0
      %p102 = por %p100, %p101
      %p103 = scmp.ne.s32.totalorder %s92, %s95
      %p104 = scmp.eq.s32.totalorder %s23, 1
      %p105 = por %p103, %p104
      %p106 = scmp.ne.s32.totalorder %s95, %s96
      %p107 = scmp.eq.s32.totalorder %s23, 0
      %p108 = por %p106, %p107
      %p109 = scmp.ne.s32.totalorder %s95, %s96
      %p110 = scmp.eq.s32.totalorder %s24, 1
      %p111 = por %p109, %p110
      %p113 = scmp.ne.s32.totalorder %s96, %s112
      %p114 = scmp.eq.s32.totalorder %s24, 0
      %p115 = por %p113, %p114
      %s116 = ssub.s32 %s26, %s33
      %s117 = ssub.s32 %s25, %s37
      %s118 = sor.u32 %s116, %s117
      %p119 = scmp.eq.s32.totalorder %s118, 0
      %s121 = sadd.s32 %s120, 1
      %s122 = scalar_select %p119, %s120, %s121
      %p125 = pneg %p119
      %p126 = scmp.eq.s32.totalorder %s18, 1
      %p127 = por %p125, %p126
      %p128 = scmp.ne.s32.totalorder %s120, %s123
      %p129 = scmp.eq.s32.totalorder %s18, 0
      %p130 = por %p128, %p129
      %p131 = scmp.ne.s32.totalorder %s120, %s123
      %p132 = scmp.eq.s32.totalorder %s23, 1
      %p133 = por %p131, %p132
      %p134 = scmp.ne.s32.totalorder %s123, %s124
      %p135 = scmp.eq.s32.totalorder %s23, 0
      %p136 = por %p134, %p135
      %p137 = scmp.ne.s32.totalorder %s123, %s124
      %p138 = scmp.eq.s32.totalorder %s24, 1
      %p139 = por %p137, %p138
      %p141 = scmp.ne.s32.totalorder %s124, %s140
      %p142 = scmp.eq.s32.totalorder %s24, 0
      %p143 = por %p141, %p142
      %s144 = ssub.s32 %s26, %s33
      %s145 = ssub.s32 %s25, %s37
      %s146 = sor.u32 %s144, %s145
      %p147 = scmp.eq.s32.totalorder %s146, 0
      %s149 = sadd.s32 %s148, 1
      %s150 = scalar_select %p147, %s148, %s149
      %p153 = pneg %p147
      %p154 = scmp.eq.s32.totalorder %s18, 1
      %p155 = por %p153, %p154
      %p156 = scmp.ne.s32.totalorder %s148, %s151
      %p157 = scmp.eq.s32.totalorder %s18, 0
      %p158 = por %p156, %p157
      %p159 = scmp.ne.s32.totalorder %s148, %s151
      %p160 = scmp.eq.s32.totalorder %s23, 1
      %p161 = por %p159, %p160
      %p162 = scmp.ne.s32.totalorder %s151, %s152
      %p163 = scmp.eq.s32.totalorder %s23, 0
      %p164 = por %p162, %p163
      %p165 = scmp.ne.s32.totalorder %s151, %s152
      %p166 = scmp.eq.s32.totalorder %s24, 1
      %p167 = por %p165, %p166
      %p169 = scmp.ne.s32.totalorder %s152, %s168
      %p170 = scmp.eq.s32.totalorder %s24, 0
      %p171 = por %p169, %p170
      %s172 = ssub.s32 %s26, %s33
      %s173 = ssub.s32 %s25, %s37
      %s174 = sor.u32 %s172, %s173
      %p175 = scmp.eq.s32.totalorder %s174, 0
      %s177 = sadd.s32 %s176, 1
      %s178 = scalar_select %p175, %s176, %s177
      %p181 = pneg %p175
      %p182 = scmp.eq.s32.totalorder %s18, 1
      %p183 = por %p181, %p182
      %p184 = scmp.ne.s32.totalorder %s176, %s179
      %p185 = scmp.eq.s32.totalorder %s18, 0
      %p186 = por %p184, %p185
      %p187 = scmp.ne.s32.totalorder %s176, %s179
      %p188 = scmp.eq.s32.totalorder %s23, 1
      %p189 = por %p187, %p188
      %p190 = scmp.ne.s32.totalorder %s179, %s180
      %p191 = scmp.eq.s32.totalorder %s23, 0
      %p192 = por %p190, %p191
      %p193 = scmp.ne.s32.totalorder %s179, %s180
      %p194 = scmp.eq.s32.totalorder %s24, 1
      %p195 = por %p193, %p194
      %p197 = scmp.ne.s32.totalorder %s180, %s196
      %p198 = scmp.eq.s32.totalorder %s24, 0
      %p199 = por %p197, %p198
      %p200 = scmp.le.s32.totalorder 1, %s18
      %p201 = scmp.lt.s32.totalorder %s18, 3
      %p202 = pnand %p200, %p201
      %p203 = pneg %p202
      // Predicated region
      $region9: #{tpu_custom_call.1} parent=5 // pred_check
        _
      $region10: #{tpu_custom_call.1} parent=5 // pred_check_branch
        %205 = sbr.rel (%p202) target = $region12
      $region11: #{tpu_custom_call.1} parent=5 // pred_region
        %s206 = ssub.s32 %s18, 1
        // Predicated region
        $region13: #{tpu_custom_call.1} parent=11 // pred_check
          %p207 = pneg %p56
        $region14: #{tpu_custom_call.1} parent=11 // pred_check_branch
          %209 = sbr.rel (%p207) target = $region16
        $region15: #{tpu_custom_call.1} parent=11 // pred_region
          %s210 = smul.u32 2, %s27
          %p211 = scmp.lt.s32.totalorder %s210, 1
          %s212 = scalar_select %p211, %s210, 1
          %s213 = smul.addr %s212, 8
          %s214 = scalar_lea.vmem %s0, %s213
          %s215 = smul.u32 2, %s27
        $region16: #{tpu_custom_call.1} parent=11 // pred_fallthru
          _
        // Predicated region
        $region17: #{tpu_custom_call.1} parent=11 // pred_check
          %p216 = pneg %p82
        $region18: #{tpu_custom_call.1} parent=11 // pred_check_branch
          %218 = sbr.rel (%p216) target = $region20
        $region19: #{tpu_custom_call.1} parent=11 // pred_region
          %s219 = smul.u32 2, %s27
          %s221 = ssub.s32 256, 256
          %222 = vsyncadd [#allocation3], %s221
          %s223 = smul.addr %s219, 128
          %s224 = scalar_lea.hbm %s1, %s223
          %s225 = sshll.u32 [#allocation2], 4
          %s226 = int_to_ptr.vmem [resolvable:$true] %s225
          %231 = dma.hbm_to_vmem [thread:$0]  %s224, 256, %s226, [#allocation3], 128, 128, 8
        $region20: #{tpu_custom_call.1} parent=11 // pred_fallthru
          _
        // Predicated region
        $region21: #{tpu_custom_call.1} parent=11 // pred_check
          %p232 = pneg %p108
        $region22: #{tpu_custom_call.1} parent=11 // pred_check_branch
          %234 = sbr.rel (%p232) target = $region24
        $region23: #{tpu_custom_call.1} parent=11 // pred_region
          %s235 = smul.u32 2, %s27
          %p236 = scmp.lt.s32.totalorder %s235, 1
          %s237 = scalar_select %p236, %s235, 1
          %s238 = smul.addr %s237, 8
          %s239 = scalar_lea.vmem %s2, %s238
          %s240 = smul.u32 2, %s27
        $region24: #{tpu_custom_call.1} parent=11 // pred_fallthru
          _
      $region12: #{tpu_custom_call.1} parent=5 // pred_fallthru
        _
      %p241 = scmp.lt.s32.totalorder %s18, 2
      // Predicated region
      $region25: #{tpu_custom_call.1} parent=5 // pred_check
        %p242 = pneg %p241
      $region26: #{tpu_custom_call.1} parent=5 // pred_check_branch
        %244 = sbr.rel (%p242) target = $region28
      $region27: #{tpu_custom_call.1} parent=5 // pred_region
        // Predicated region
        $region29: #{tpu_custom_call.1} parent=27 // pred_check
          %p245 = pneg %p130
        $region30: #{tpu_custom_call.1} parent=27 // pred_check_branch
          %247 = sbr.rel (%p245) target = $region32
        $region31: #{tpu_custom_call.1} parent=27 // pred_region
          %s248 = sand.u32 %s18, 1
          %s249 = scalar_lea.sflag [#allocation6], %s248
          %s250 = sand.u32 %s120, 1
          %s251 = smul.addr %s250, 64
          %s252 = scalar_lea.vmem [#allocation5], %s251
          %s253 = smul.u32 2, %s25
          %s255 = ssub.s32 1024, 1024
          %256 = vsyncadd %s249, %s255
          %s257 = smul.addr %s253, 4
          %s258 = smul.addr %s26, 8
          %s259 = sadd.s32 %s257, %s258
          %s260 = smul.addr %s259, 128
          %s261 = scalar_lea.hbm %s3, %s260
          %s262 = sshll.u32 %s252, 4
          %s263 = int_to_ptr.vmem [resolvable:$true] %s262
          %268 = dma.hbm_to_vmem [thread:$0]  %s261, 1024, %s263, %s249, 128, 128, 8
        $region32: #{tpu_custom_call.1} parent=27 // pred_fallthru
          _
        // Predicated region
        $region33: #{tpu_custom_call.1} parent=27 // pred_check
          %p269 = pneg %p158
        $region34: #{tpu_custom_call.1} parent=27 // pred_check_branch
          %271 = sbr.rel (%p269) target = $region36
        $region35: #{tpu_custom_call.1} parent=27 // pred_region
          %s272 = sand.u32 %s18, 1
          %s273 = scalar_lea.sflag [#allocation6], %s272
          %s274 = sand.u32 %s148, 1
          %s275 = smul.addr %s274, 64
          %s276 = scalar_lea.vmem [#allocation7], %s275
          %s277 = smul.u32 2, %s25
          %s279 = ssub.s32 1024, 1024
          %280 = vsyncadd %s273, %s279
          %s281 = smul.addr %s277, 4
          %s282 = smul.addr %s26, 8
          %s283 = sadd.s32 %s281, %s282
          %s284 = smul.addr %s283, 128
          %s285 = scalar_lea.hbm %s4, %s284
          %s286 = sshll.u32 %s276, 4
          %s287 = int_to_ptr.vmem [resolvable:$true] %s286
          %292 = dma.hbm_to_vmem [thread:$0]  %s285, 1024, %s287, %s273, 128, 128, 8
        $region36: #{tpu_custom_call.1} parent=27 // pred_fallthru
          _
      $region28: #{tpu_custom_call.1} parent=5 // pred_fallthru
        _
      %p293 = scmp.le.s32.totalorder 1, %s18
      %p294 = scmp.lt.s32.totalorder %s18, 3
      %p295 = pnand %p293, %p294
      %p296 = pneg %p295
      // Predicated region
      $region37: #{tpu_custom_call.1} parent=5 // pred_check
        _
      $region38: #{tpu_custom_call.1} parent=5 // pred_check_branch
        %298 = sbr.rel (%p295) target = $region40
      $region39: #{tpu_custom_call.1} parent=5 // pred_region
        %s299 = ssub.s32 %s18, 1
        // Predicated region
        $region41: #{tpu_custom_call.1} parent=39 // pred_check
          %p300 = pneg %p82
        $region42: #{tpu_custom_call.1} parent=39 // pred_check_branch
          %302 = sbr.rel (%p300) target = $region44
        $region43: #{tpu_custom_call.1} parent=39 // pred_region
          %303 = dma.done [#allocation3], 256
        $region44: #{tpu_custom_call.1} parent=39 // pred_fallthru
          _
        %s304 = sand.u32 %s23, 1
        %s305 = scalar_lea.sflag [#allocation6], %s304
        %s306 = sand.u32 %s123, 1
        %s307 = smul.addr %s306, 64
        %s308 = scalar_lea.vmem [#allocation5], %s307
        // Predicated region
        $region45: #{tpu_custom_call.1} parent=39 // pred_check
          %p309 = pneg %p136
        $region46: #{tpu_custom_call.1} parent=39 // pred_check_branch
          %311 = sbr.rel (%p309) target = $region48
        $region47: #{tpu_custom_call.1} parent=39 // pred_region
          %312 = dma.done %s305, 1024
        $region48: #{tpu_custom_call.1} parent=39 // pred_fallthru
          _
        %s313 = sand.u32 %s23, 1
        %s314 = scalar_lea.sflag [#allocation6], %s313
        %s315 = sand.u32 %s151, 1
        %s316 = smul.addr %s315, 64
        %s317 = scalar_lea.vmem [#allocation7], %s316
        // Predicated region
        $region49: #{tpu_custom_call.1} parent=39 // pred_check
          %p318 = pneg %p164
        $region50: #{tpu_custom_call.1} parent=39 // pred_check_branch
          %320 = sbr.rel (%p318) target = $region52
        $region51: #{tpu_custom_call.1} parent=39 // pred_region
          %321 = dma.done %s314, 1024
        $region52: #{tpu_custom_call.1} parent=39 // pred_fallthru
          _
        %s322 = smul.u32 2, %s27
        %p323 = scmp.lt.s32.totalorder %s322, 1
        %s324 = scalar_select %p323, %s322, 1
        %s325 = smul.addr %s324, 8
        %s326 = scalar_lea.vmem %s0, %s325
        %p327 = pneg %p56
        %p328 = pneg %p53
        %p329 = pneg %p82
        %p330 = pneg %p79
        %s331 = smul.u32 2, %s27
        %p332 = scmp.lt.s32.totalorder %s331, 1
        %s333 = scalar_select %p332, %s331, 1
        %s334 = smul.addr %s333, 8
        %s335 = scalar_lea.vmem %s2, %s334
        %p336 = pneg %p108
        %p337 = pneg %p105
        %s338 = sand.u32 %s23, 1
        %s339 = scalar_lea.sflag [#allocation6], %s338
        %s340 = sand.u32 %s123, 1
        %s341 = smul.addr %s340, 64
        %s342 = scalar_lea.vmem [#allocation5], %s341
        %p343 = pneg %p136
        %p344 = pneg %p133
        %s345 = sand.u32 %s23, 1
        %s346 = scalar_lea.sflag [#allocation6], %s345
        %s347 = sand.u32 %s151, 1
        %s348 = smul.addr %s347, 64
        %s349 = scalar_lea.vmem [#allocation7], %s348
        %p350 = pneg %p164
        %p351 = pneg %p161
        %p352 = pneg %p192
        %p353 = pneg %p189
        %s354 = sand.u32 %s179, 1
        %s355 = scalar_lea.sflag [#allocation4], %s354
        %s356 = sand.u32 %s179, 1
        %s357 = smul.addr %s356, 64
        %s358 = scalar_lea.vmem [#allocation8], %s357
        %s359 = smul.u32 2, %s27
        %p360 = scmp.lt.s32.totalorder %s359, 1
        %s361 = scalar_select %p360, %s359, 1
        %s362 = smul.addr %s361, 8
        %s363 = scalar_lea.vmem %s0, %s362
        %s364 = smul.u32 2, %s27
        %s365 = smul.u32 2, %s27
        %s366 = smul.u32 2, %s27
        %p367 = scmp.lt.s32.totalorder %s366, 1
        %s368 = scalar_select %p367, %s366, 1
        %s369 = smul.addr %s368, 8
        %s370 = scalar_lea.vmem %s2, %s369
        %s371 = smul.u32 2, %s27
        %s372 = smul.u32 2, %s27
        %s373 = smul.u32 2, %s27
        %s374 = smul.u32 2, %s27
        %v375 = vld [vmem:[%s363] sm:$0xff]
        %v376 = vld [vmem:[%s363 + $0x8] sm:$0xff]
        %v377 = vld [vmem:[#allocation2] sm:$0xff]
        %v378 = vld [vmem:[#allocation2 + $0x8] sm:$0xff]
        %v379 = vld [vmem:[%s370] sm:$0xff]
        %v380 = vld [vmem:[%s370 + $0x8] sm:$0xff]
        %v381 = vld [vmem:[%s308] sm:$0xff]
        %v382 = vld [vmem:[%s308 + $0x8] sm:$0xff]
        %v383 = vld [vmem:[%s308 + $0x10] sm:$0xff]
        %v384 = vld [vmem:[%s308 + $0x18] sm:$0xff]
        %v385 = vld [vmem:[%s308 + $0x20] sm:$0xff]
        %v386 = vld [vmem:[%s308 + $0x28] sm:$0xff]
        %v387 = vld [vmem:[%s308 + $0x30] sm:$0xff]
        %v388 = vld [vmem:[%s308 + $0x38] sm:$0xff]
        %v389 = vld [vmem:[%s317] sm:$0xff]
        %v390 = vld [vmem:[%s317 + $0x8] sm:$0xff]
        %v391 = vld [vmem:[%s317 + $0x10] sm:$0xff]
        %v392 = vld [vmem:[%s317 + $0x18] sm:$0xff]
        %v393 = vld [vmem:[%s317 + $0x20] sm:$0xff]
        %v394 = vld [vmem:[%s317 + $0x28] sm:$0xff]
        %v395 = vld [vmem:[%s317 + $0x30] sm:$0xff]
        %v396 = vld [vmem:[%s317 + $0x38] sm:$0xff]
        %vm397 = vcmask 261120
        %v399 = vsel %vm397, %v375, 0
        %v402 = vsel %vm397, %v377, 0
        %404 = vmatprep.subr.mxu0 0.0
        %405 = vmatpush1.msra.mxu0 %v381
        %406 = vmatprep.subr.mxu0 0.0
        %407 = vmatpush1.msra.mxu0 %v382
        %408 = vmatprep.subr.mxu0 0.0
        %409 = vmatpush1.msra.mxu0 %v383
        %410 = vmatprep.subr.mxu0 0.0
        %411 = vmatpush1.msra.mxu0 %v384
        %412 = vmatprep.subr.mxu0 0.0
        %413 = vmatpush1.msra.mxu0 0.0
        %414 = vmatprep.subr.mxu0 0.0
        %415 = vmatpush1.msra.mxu0 0.0
        %416 = vmatprep.subr.mxu0 0.0
        %417 = vmatpush1.msra.mxu0 0.0
        %418 = vmatprep.subr.mxu0 0.0
        %419 = vmatpush1.msra.mxu0 0.0
        %420 = vmatprep.subr.mxu0 0.0
        %421 = vmatpush1.msra.mxu0 0.0
        %422 = vmatprep.subr.mxu0 0.0
        %423 = vmatpush1.msra.mxu0 0.0
        %424 = vmatprep.subr.mxu0 0.0
        %425 = vmatpush1.msra.mxu0 0.0
        %426 = vmatprep.subr.mxu0 0.0
        %427 = vmatpush1.msra.mxu0 0.0
        %428 = vmatprep.subr.mxu0 0.0
        %429 = vmatpush1.msra.mxu0 0.0
        %430 = vmatprep.subr.mxu0 0.0
        %431 = vmatpush1.msra.mxu0 0.0
        %432 = vmatprep.subr.mxu0 0.0
        %433 = vmatpush1.msra.mxu0 0.0
        %434 = vmatprep.subr.mxu0 0.0
        %435 = vmatpush1.msra.mxu0 0.0
        %436 = vmatprep.subr.mxu0 0.0
        %437 = vmatpush1.msra.mxu0 0.0
        %438 = vmatprep.subr.mxu0 0.0
        %439 = vmatpush1.msra.mxu0 0.0
        %440 = vmatprep.subr.mxu0 0.0
        %441 = vmatpush1.msra.mxu0 0.0
        %442 = vmatprep.subr.mxu0 0.0
        %443 = vmatpush1.msra.mxu0 0.0
        %444 = vmatprep.subr.mxu0 0.0
        %445 = vmatpush1.msra.mxu0 0.0
        %446 = vmatprep.subr.mxu0 0.0
        %447 = vmatpush1.msra.mxu0 0.0
        %448 = vmatprep.subr.mxu0 0.0
        %449 = vmatpush1.msra.mxu0 0.0
        %450 = vmatprep.subr.mxu0 0.0
        %451 = vmatpush1.msra.mxu0 0.0
        %452 = vmatprep.subr.mxu0 0.0
        %453 = vmatpush1.msra.mxu0 0.0
        %454 = vmatprep.subr.mxu0 0.0
        %455 = vmatpush1.msra.mxu0 0.0
        %456 = vmatprep.subr.mxu0 0.0
        %457 = vmatpush1.msra.mxu0 0.0
        %458 = vmatprep.subr.mxu0 0.0
        %459 = vmatpush1.msra.mxu0 0.0
        %460 = vmatprep.subr.mxu0 0.0
        %461 = vmatpush1.msra.mxu0 0.0
        %462 = vmatprep.subr.mxu0 0.0
        %463 = vmatpush1.msra.mxu0 0.0
        %464 = vmatprep.subr.mxu0 0.0
        %465 = vmatpush1.msra.mxu0 0.0
        %466 = vmatprep.subr.mxu0 0.0
        %467 = vmatpush1.msra.mxu0 0.0
        %468 = vmatprep.mubr.f32.mxu0 0.0
        %469 = vmatmul.mubr.f32.gmra.mrb[0].mxu0 %v399
        %v470 = vpop.f32.mrb[0].mxu0
        %v471 = vadd.f32 0.0, %v470
        %v472 = vpop.f32.mrb[0].mxu0
        %473 = vmatprep.mubr.f32.mxu0 0.0
        %474 = vmatmul.mubr.f32.gmra.mrb[0].mxu0 %v402
        %v475 = vpop.f32.mrb[0].mxu0
        %v476 = vadd.f32 0.0, %v475
        %v477 = vpop.f32.mrb[0].mxu0
        %478 = vdwg.mxu0
        %v480 = vsel %vm397, %v376, 0
        %v483 = vsel %vm397, %v378, 0
        %485 = vmatprep.subr.mxu0 0.0
        %486 = vmatpush1.msra.mxu0 %v385
        %487 = vmatprep.subr.mxu0 0.0
        %488 = vmatpush1.msra.mxu0 %v386
        %489 = vmatprep.subr.mxu0 0.0
        %490 = vmatpush1.msra.mxu0 %v387
        %491 = vmatprep.subr.mxu0 0.0
        %492 = vmatpush1.msra.mxu0 %v388
        %493 = vmatprep.subr.mxu0 0.0
        %494 = vmatpush1.msra.mxu0 0.0
        %495 = vmatprep.subr.mxu0 0.0
        %496 = vmatpush1.msra.mxu0 0.0
        %497 = vmatprep.subr.mxu0 0.0
        %498 = vmatpush1.msra.mxu0 0.0
        %499 = vmatprep.subr.mxu0 0.0
        %500 = vmatpush1.msra.mxu0 0.0
        %501 = vmatprep.subr.mxu0 0.0
        %502 = vmatpush1.msra.mxu0 0.0
        %503 = vmatprep.subr.mxu0 0.0
        %504 = vmatpush1.msra.mxu0 0.0
        %505 = vmatprep.subr.mxu0 0.0
        %506 = vmatpush1.msra.mxu0 0.0
        %507 = vmatprep.subr.mxu0 0.0
        %508 = vmatpush1.msra.mxu0 0.0
        %509 = vmatprep.subr.mxu0 0.0
        %510 = vmatpush1.msra.mxu0 0.0
        %511 = vmatprep.subr.mxu0 0.0
        %512 = vmatpush1.msra.mxu0 0.0
        %513 = vmatprep.subr.mxu0 0.0
        %514 = vmatpush1.msra.mxu0 0.0
        %515 = vmatprep.subr.mxu0 0.0
        %516 = vmatpush1.msra.mxu0 0.0
        %517 = vmatprep.subr.mxu0 0.0
        %518 = vmatpush1.msra.mxu0 0.0
        %519 = vmatprep.subr.mxu0 0.0
        %520 = vmatpush1.msra.mxu0 0.0
        %521 = vmatprep.subr.mxu0 0.0
        %522 = vmatpush1.msra.mxu0 0.0
        %523 = vmatprep.subr.mxu0 0.0
        %524 = vmatpush1.msra.mxu0 0.0
        %525 = vmatprep.subr.mxu0 0.0
        %526 = vmatpush1.msra.mxu0 0.0
        %527 = vmatprep.subr.mxu0 0.0
        %528 = vmatpush1.msra.mxu0 0.0
        %529 = vmatprep.subr.mxu0 0.0
        %530 = vmatpush1.msra.mxu0 0.0
        %531 = vmatprep.subr.mxu0 0.0
        %532 = vmatpush1.msra.mxu0 0.0
        %533 = vmatprep.subr.mxu0 0.0
        %534 = vmatpush1.msra.mxu0 0.0
        %535 = vmatprep.subr.mxu0 0.0
        %536 = vmatpush1.msra.mxu0 0.0
        %537 = vmatprep.subr.mxu0 0.0
        %538 = vmatpush1.msra.mxu0 0.0
        %539 = vmatprep.subr.mxu0 0.0
        %540 = vmatpush1.msra.mxu0 0.0
        %541 = vmatprep.subr.mxu0 0.0
        %542 = vmatpush1.msra.mxu0 0.0
        %543 = vmatprep.subr.mxu0 0.0
        %544 = vmatpush1.msra.mxu0 0.0
        %545 = vmatprep.subr.mxu0 0.0
        %546 = vmatpush1.msra.mxu0 0.0
        %547 = vmatprep.subr.mxu0 0.0
        %548 = vmatpush1.msra.mxu0 0.0
        %549 = vmatprep.mubr.f32.mxu0 0.0
        %550 = vmatmul.mubr.f32.gmra.mrb[0].mxu0 %v480
        %v551 = vpop.f32.mrb[0].mxu0
        %v552 = vadd.f32 0.0, %v551
        %v553 = vpop.f32.mrb[0].mxu0
        %554 = vmatprep.mubr.f32.mxu0 0.0
        %555 = vmatmul.mubr.f32.gmra.mrb[0].mxu0 %v483
        %v556 = vpop.f32.mrb[0].mxu0
        %v557 = vadd.f32 0.0, %v556
        %v558 = vpop.f32.mrb[0].mxu0
        %559 = vdwg.mxu0
        %560 = vmatprep.subr.mxu0 0.0
        %561 = vmatpush1.msra.mxu0 %v389
        %562 = vmatprep.subr.mxu0 0.0
        %563 = vmatpush1.msra.mxu0 %v390
        %564 = vmatprep.subr.mxu0 0.0
        %565 = vmatpush1.msra.mxu0 %v391
        %566 = vmatprep.subr.mxu0 0.0
        %567 = vmatpush1.msra.mxu0 %v392
        %568 = vmatprep.subr.mxu0 0.0
        %569 = vmatpush1.msra.mxu0 0.0
        %570 = vmatprep.subr.mxu0 0.0
        %571 = vmatpush1.msra.mxu0 0.0
        %572 = vmatprep.subr.mxu0 0.0
        %573 = vmatpush1.msra.mxu0 0.0
        %574 = vmatprep.subr.mxu0 0.0
        %575 = vmatpush1.msra.mxu0 0.0
        %576 = vmatprep.subr.mxu0 0.0
        %577 = vmatpush1.msra.mxu0 0.0
        %578 = vmatprep.subr.mxu0 0.0
        %579 = vmatpush1.msra.mxu0 0.0
        %580 = vmatprep.subr.mxu0 0.0
        %581 = vmatpush1.msra.mxu0 0.0
        %582 = vmatprep.subr.mxu0 0.0
        %583 = vmatpush1.msra.mxu0 0.0
        %584 = vmatprep.subr.mxu0 0.0
        %585 = vmatpush1.msra.mxu0 0.0
        %586 = vmatprep.subr.mxu0 0.0
        %587 = vmatpush1.msra.mxu0 0.0
        %588 = vmatprep.subr.mxu0 0.0
        %589 = vmatpush1.msra.mxu0 0.0
        %590 = vmatprep.subr.mxu0 0.0
        %591 = vmatpush1.msra.mxu0 0.0
        %592 = vmatprep.subr.mxu0 0.0
        %593 = vmatpush1.msra.mxu0 0.0
        %594 = vmatprep.subr.mxu0 0.0
        %595 = vmatpush1.msra.mxu0 0.0
        %596 = vmatprep.subr.mxu0 0.0
        %597 = vmatpush1.msra.mxu0 0.0
        %598 = vmatprep.subr.mxu0 0.0
        %599 = vmatpush1.msra.mxu0 0.0
        %600 = vmatprep.subr.mxu0 0.0
        %601 = vmatpush1.msra.mxu0 0.0
        %602 = vmatprep.subr.mxu0 0.0
        %603 = vmatpush1.msra.mxu0 0.0
        %604 = vmatprep.subr.mxu0 0.0
        %605 = vmatpush1.msra.mxu0 0.0
        %606 = vmatprep.subr.mxu0 0.0
        %607 = vmatpush1.msra.mxu0 0.0
        %608 = vmatprep.subr.mxu0 0.0
        %609 = vmatpush1.msra.mxu0 0.0
        %610 = vmatprep.subr.mxu0 0.0
        %611 = vmatpush1.msra.mxu0 0.0
        %612 = vmatprep.subr.mxu0 0.0
        %613 = vmatpush1.msra.mxu0 0.0
        %614 = vmatprep.subr.mxu0 0.0
        %615 = vmatpush1.msra.mxu0 0.0
        %616 = vmatprep.subr.mxu0 0.0
        %617 = vmatpush1.msra.mxu0 0.0
        %618 = vmatprep.subr.mxu0 0.0
        %619 = vmatpush1.msra.mxu0 0.0
        %620 = vmatprep.subr.mxu0 0.0
        %621 = vmatpush1.msra.mxu0 0.0
        %622 = vmatprep.subr.mxu0 0.0
        %623 = vmatpush1.msra.mxu0 0.0
        %624 = vmatprep.mubr.f32.mxu0 0.0
        %625 = vmatmul.mubr.f32.gmra.mrb[0].mxu0 %v399
        %v626 = vpop.f32.mrb[0].mxu0
        %v627 = vadd.f32 0.0, %v626
        %v628 = vpop.f32.mrb[0].mxu0
        %629 = vmatprep.mubr.f32.mxu0 0.0
        %630 = vmatmul.mubr.f32.gmra.mrb[0].mxu0 %v402
        %v631 = vpop.f32.mrb[0].mxu0
        %v632 = vadd.f32 0.0, %v631
        %v633 = vpop.f32.mrb[0].mxu0
        %634 = vdwg.mxu0
        %635 = vmatprep.subr.mxu0 0.0
        %636 = vmatpush1.msra.mxu0 %v393
        %637 = vmatprep.subr.mxu0 0.0
        %638 = vmatpush1.msra.mxu0 %v394
        %639 = vmatprep.subr.mxu0 0.0
        %640 = vmatpush1.msra.mxu0 %v395
        %641 = vmatprep.subr.mxu0 0.0
        %642 = vmatpush1.msra.mxu0 %v396
        %643 = vmatprep.subr.mxu0 0.0
        %644 = vmatpush1.msra.mxu0 0.0
        %645 = vmatprep.subr.mxu0 0.0
        %646 = vmatpush1.msra.mxu0 0.0
        %647 = vmatprep.subr.mxu0 0.0
        %648 = vmatpush1.msra.mxu0 0.0
        %649 = vmatprep.subr.mxu0 0.0
        %650 = vmatpush1.msra.mxu0 0.0
        %651 = vmatprep.subr.mxu0 0.0
        %652 = vmatpush1.msra.mxu0 0.0
        %653 = vmatprep.subr.mxu0 0.0
        %654 = vmatpush1.msra.mxu0 0.0
        %655 = vmatprep.subr.mxu0 0.0
        %656 = vmatpush1.msra.mxu0 0.0
        %657 = vmatprep.subr.mxu0 0.0
        %658 = vmatpush1.msra.mxu0 0.0
        %659 = vmatprep.subr.mxu0 0.0
        %660 = vmatpush1.msra.mxu0 0.0
        %661 = vmatprep.subr.mxu0 0.0
        %662 = vmatpush1.msra.mxu0 0.0
        %663 = vmatprep.subr.mxu0 0.0
        %664 = vmatpush1.msra.mxu0 0.0
        %665 = vmatprep.subr.mxu0 0.0
        %666 = vmatpush1.msra.mxu0 0.0
        %667 = vmatprep.subr.mxu0 0.0
        %668 = vmatpush1.msra.mxu0 0.0
        %669 = vmatprep.subr.mxu0 0.0
        %670 = vmatpush1.msra.mxu0 0.0
        %671 = vmatprep.subr.mxu0 0.0
        %672 = vmatpush1.msra.mxu0 0.0
        %673 = vmatprep.subr.mxu0 0.0
        %674 = vmatpush1.msra.mxu0 0.0
        %675 = vmatprep.subr.mxu0 0.0
        %676 = vmatpush1.msra.mxu0 0.0
        %677 = vmatprep.subr.mxu0 0.0
        %678 = vmatpush1.msra.mxu0 0.0
        %679 = vmatprep.subr.mxu0 0.0
        %680 = vmatpush1.msra.mxu0 0.0
        %681 = vmatprep.subr.mxu0 0.0
        %682 = vmatpush1.msra.mxu0 0.0
        %683 = vmatprep.subr.mxu0 0.0
        %684 = vmatpush1.msra.mxu0 0.0
        %685 = vmatprep.subr.mxu0 0.0
        %686 = vmatpush1.msra.mxu0 0.0
        %687 = vmatprep.subr.mxu0 0.0
        %688 = vmatpush1.msra.mxu0 0.0
        %689 = vmatprep.subr.mxu0 0.0
        %690 = vmatpush1.msra.mxu0 0.0
        %691 = vmatprep.subr.mxu0 0.0
        %692 = vmatpush1.msra.mxu0 0.0
        %693 = vmatprep.subr.mxu0 0.0
        %694 = vmatpush1.msra.mxu0 0.0
        %695 = vmatprep.subr.mxu0 0.0
        %696 = vmatpush1.msra.mxu0 0.0
        %697 = vmatprep.subr.mxu0 0.0
        %698 = vmatpush1.msra.mxu0 0.0
        %699 = vmatprep.mubr.f32.mxu0 0.0
        %700 = vmatmul.mubr.f32.gmra.mrb[0].mxu0 %v480
        %v701 = vpop.f32.mrb[0].mxu0
        %v702 = vadd.f32 0.0, %v701
        %v703 = vpop.f32.mrb[0].mxu0
        %704 = vmatprep.mubr.f32.mxu0 0.0
        %705 = vmatmul.mubr.f32.gmra.mrb[0].mxu0 %v483
        %v706 = vpop.f32.mrb[0].mxu0
        %v707 = vadd.f32 0.0, %v706
        %v708 = vpop.f32.mrb[0].mxu0
        %709 = vdwg.mxu0
        %v710 = vsub.f32 %v471, %v632
        %v711 = vsub.f32 %v552, %v707
        %v712 = vadd.f32 %v627, %v476
        %v713 = vadd.f32 %v702, %v557
        %v714 = vmul.f32 %v710, %v375
        %v715 = vmul.f32 %v711, %v376
        %v716 = vmul.f32 %v712, %v377
        %v717 = vmul.f32 %v713, %v378
        %v718 = vadd.f32 %v714, %v716
        %v719 = vadd.f32 %v715, %v717
        %v720 = vsel %vm397, %v718, 0.0
        %721 = vadd.xlane.f32.xlu0 %v720
        %v722 = vpop.xlane.xlu0 %721
        %v723 = vsel %vm397, %v719, 0.0
        %724 = vadd.xlane.f32.xlu0 %v723
        %v725 = vpop.xlane.xlu0 %724
        %v726 = vmul.f32 %v722, %v379
        %v727 = vmul.f32 %v725, %v380
        %vm728 = vcmask 7168
        %v729 = vsel %vm728, %v726, -inf
        %v730 = vrot.slane %v729, 4
        %v731 = vmax.f32 %v729, %v730
        %v732 = vrot.slane %v731, 2
        %v733 = vmax.f32 %v731, %v732
        %v734 = vrot.slane %v733, 1
        %v735 = vmax.f32 %v733, %v734
        %v736 = vsel %vm728, %v727, -inf
        %v737 = vrot.slane %v736, 4
        %v738 = vmax.f32 %v736, %v737
        %v739 = vrot.slane %v738, 2
        %v740 = vmax.f32 %v738, %v739
        %v741 = vrot.slane %v740, 1
        %v742 = vmax.f32 %v740, %v741
        %v743 = vsub.f32 %v726, %v735
        %v744 = vsub.f32 %v727, %v742
        %v745 = vmul.f32 %v743, 1.442695
        %v746 = vpow.pop %v745
        %v747 = vmul.f32 %v744, 1.442695
        %v748 = vpow.pop %v747
        %v749 = vsel %vm728, %v746, 0.0
        %v750 = vrot.slane %v749, 4
        %v751 = vadd.f32 %v749, %v750
        %v752 = vrot.slane %v751, 2
        %v753 = vadd.f32 %v751, %v752
        %v754 = vrot.slane %v753, 1
        %v755 = vadd.f32 %v753, %v754
        %v756 = vsel %vm728, %v748, 0.0
        %v757 = vrot.slane %v756, 4
        %v758 = vadd.f32 %v756, %v757
        %v759 = vrot.slane %v758, 2
        %v760 = vadd.f32 %v758, %v759
        %v761 = vrot.slane %v760, 1
        %v762 = vadd.f32 %v760, %v761
        %v763 = vrcp.pop %v755
        %v764 = vrcp.pop %v762
        %v765 = vmul.f32 %v746, %v763
        %v766 = vmul.f32 %v748, %v764
        %768 = vset.pattern.permute.xlu0 0
        %769 = vperm.xlu0 %768, %v765
        %v770 = vpop.permute.xlu0 %769
        %773 = vset.pattern.permute.xlu0 0
        %774 = vperm.xlu0 %773, %v766
        %v775 = vpop.permute.xlu0 %774
        %v777 = vmul.f32 %v375, %v770
        %v778 = vmul.f32 %v376, %v775
        %v779 = vmul.f32 %v377, %v770
        %v780 = vmul.f32 %v378, %v775
        %781 = vxpose.xlu0.b32.start [1/16] %v777, 128
        %782 = vxpose.xlu0.b32.cont [2/16] %v779, 128
        %783 = vxpose.xlu0.b32.cont [3/16] 0.0, 128
        %784 = vxpose.xlu0.b32.cont [4/16] 0.0, 128
        %785 = vxpose.xlu0.b32.cont [5/16] 0.0, 128
        %786 = vxpose.xlu0.b32.cont [6/16] 0.0, 128
        %787 = vxpose.xlu0.b32.cont [7/16] 0.0, 128
        %788 = vxpose.xlu0.b32.cont [8/16] 0.0, 128
        %789 = vxpose.xlu0.b32.cont [9/16] 0.0, 128
        %790 = vxpose.xlu0.b32.cont [10/16] 0.0, 128
        %791 = vxpose.xlu0.b32.cont [11/16] 0.0, 128
        %792 = vxpose.xlu0.b32.cont [12/16] 0.0, 128
        %793 = vxpose.xlu0.b32.cont [13/16] 0.0, 128
        %794 = vxpose.xlu0.b32.cont [14/16] 0.0, 128
        %795 = vxpose.xlu0.b32.cont [15/16] 0.0, 128
        %796 = vxpose.xlu0.b32.end [16/16] 0.0, 128
        %v797 = vpop.trf.xlu0
        %v798 = vpop.trf.xlu0
        %v799 = vpop.trf.xlu0
        %v800 = vpop.trf.xlu0
        %v801 = vpop.trf.xlu0
        %v802 = vpop.trf.xlu0
        %v803 = vpop.trf.xlu0
        %v804 = vpop.trf.xlu0
        %v805 = vpop.trf.xlu0
        %v806 = vpop.trf.xlu0
        %v807 = vpop.trf.xlu0
        %v808 = vpop.trf.xlu0
        %v809 = vpop.trf.xlu0
        %v810 = vpop.trf.xlu0
        %v811 = vpop.trf.xlu0
        %v812 = vpop.trf.xlu0
        %vm813 = vcmask 130048
        %v815 = vsel %vm813, %v797, 0
        %v818 = vsel %vm813, %v798, 0
        %v821 = vsel %vm813, %v799, 0
        %v824 = vsel %vm813, %v800, 0
        %826 = vmatprep.subr.mxu0 0.0
        %827 = vmatpush1.msra.mxu0 %v375
        %828 = vmatprep.subr.mxu0 0.0
        %829 = vmatpush1.msra.mxu0 %v377
        %830 = vmatprep.subr.mxu0 0.0
        %831 = vmatpush1.msra.mxu0 0.0
        %832 = vmatprep.subr.mxu0 0.0
        %833 = vmatpush1.msra.mxu0 0.0
        %834 = vmatprep.subr.mxu0 0.0
        %835 = vmatpush1.msra.mxu0 0.0
        %836 = vmatprep.subr.mxu0 0.0
        %837 = vmatpush1.msra.mxu0 0.0
        %838 = vmatprep.subr.mxu0 0.0
        %839 = vmatpush1.msra.mxu0 0.0
        %840 = vmatprep.subr.mxu0 0.0
        %841 = vmatpush1.msra.mxu0 0.0
        %842 = vmatprep.subr.mxu0 0.0
        %843 = vmatpush1.msra.mxu0 0.0
        %844 = vmatprep.subr.mxu0 0.0
        %845 = vmatpush1.msra.mxu0 0.0
        %846 = vmatprep.subr.mxu0 0.0
        %847 = vmatpush1.msra.mxu0 0.0
        %848 = vmatprep.subr.mxu0 0.0
        %849 = vmatpush1.msra.mxu0 0.0
        %850 = vmatprep.subr.mxu0 0.0
        %851 = vmatpush1.msra.mxu0 0.0
        %852 = vmatprep.subr.mxu0 0.0
        %853 = vmatpush1.msra.mxu0 0.0
        %854 = vmatprep.subr.mxu0 0.0
        %855 = vmatpush1.msra.mxu0 0.0
        %856 = vmatprep.subr.mxu0 0.0
        %857 = vmatpush1.msra.mxu0 0.0
        %858 = vmatprep.subr.mxu0 0.0
        %859 = vmatpush1.msra.mxu0 0.0
        %860 = vmatprep.subr.mxu0 0.0
        %861 = vmatpush1.msra.mxu0 0.0
        %862 = vmatprep.subr.mxu0 0.0
        %863 = vmatpush1.msra.mxu0 0.0
        %864 = vmatprep.subr.mxu0 0.0
        %865 = vmatpush1.msra.mxu0 0.0
        %866 = vmatprep.subr.mxu0 0.0
        %867 = vmatpush1.msra.mxu0 0.0
        %868 = vmatprep.subr.mxu0 0.0
        %869 = vmatpush1.msra.mxu0 0.0
        %870 = vmatprep.subr.mxu0 0.0
        %871 = vmatpush1.msra.mxu0 0.0
        %872 = vmatprep.subr.mxu0 0.0
        %873 = vmatpush1.msra.mxu0 0.0
        %874 = vmatprep.subr.mxu0 0.0
        %875 = vmatpush1.msra.mxu0 0.0
        %876 = vmatprep.subr.mxu0 0.0
        %877 = vmatpush1.msra.mxu0 0.0
        %878 = vmatprep.subr.mxu0 0.0
        %879 = vmatpush1.msra.mxu0 0.0
        %880 = vmatprep.subr.mxu0 0.0
        %881 = vmatpush1.msra.mxu0 0.0
        %882 = vmatprep.subr.mxu0 0.0
        %883 = vmatpush1.msra.mxu0 0.0
        %884 = vmatprep.subr.mxu0 0.0
        %885 = vmatpush1.msra.mxu0 0.0
        %886 = vmatprep.subr.mxu0 0.0
        %887 = vmatpush1.msra.mxu0 0.0
        %888 = vmatprep.subr.mxu0 0.0
        %889 = vmatpush1.msra.mxu0 0.0
        %890 = vmatprep.mubr.f32.mxu0 0.0
        %891 = vmatmul.mubr.f32.gmra.mrb[0].mxu0 %v815
        %v892 = vpop.f32.mrb[0].mxu0
        %v893 = vadd.f32 0.0, %v892
        %v894 = vpop.f32.mrb[0].mxu0
        %895 = vmatprep.mubr.f32.mxu0 0.0
        %896 = vmatmul.mubr.f32.gmra.mrb[0].mxu0 %v818
        %v897 = vpop.f32.mrb[0].mxu0
        %v898 = vadd.f32 0.0, %v897
        %v899 = vpop.f32.mrb[0].mxu0
        %900 = vmatprep.mubr.f32.mxu0 0.0
        %901 = vmatmul.mubr.f32.gmra.mrb[0].mxu0 %v821
        %v902 = vpop.f32.mrb[0].mxu0
        %v903 = vadd.f32 0.0, %v902
        %v904 = vpop.f32.mrb[0].mxu0
        %905 = vmatprep.mubr.f32.mxu0 0.0
        %906 = vmatmul.mubr.f32.gmra.mrb[0].mxu0 %v824
        %v907 = vpop.f32.mrb[0].mxu0
        %v908 = vadd.f32 0.0, %v907
        %v909 = vpop.f32.mrb[0].mxu0
        %910 = vdwg.mxu0
        %911 = vxpose.xlu0.b32.start [1/16] %v778, 128
        %912 = vxpose.xlu0.b32.cont [2/16] %v780, 128
        %913 = vxpose.xlu0.b32.cont [3/16] 0.0, 128
        %914 = vxpose.xlu0.b32.cont [4/16] 0.0, 128
        %915 = vxpose.xlu0.b32.cont [5/16] 0.0, 128
        %916 = vxpose.xlu0.b32.cont [6/16] 0.0, 128
        %917 = vxpose.xlu0.b32.cont [7/16] 0.0, 128
        %918 = vxpose.xlu0.b32.cont [8/16] 0.0, 128
        %919 = vxpose.xlu0.b32.cont [9/16] 0.0, 128
        %920 = vxpose.xlu0.b32.cont [10/16] 0.0, 128
        %921 = vxpose.xlu0.b32.cont [11/16] 0.0, 128
        %922 = vxpose.xlu0.b32.cont [12/16] 0.0, 128
        %923 = vxpose.xlu0.b32.cont [13/16] 0.0, 128
        %924 = vxpose.xlu0.b32.cont [14/16] 0.0, 128
        %925 = vxpose.xlu0.b32.cont [15/16] 0.0, 128
        %926 = vxpose.xlu0.b32.end [16/16] 0.0, 128
        %v927 = vpop.trf.xlu0
        %v928 = vpop.trf.xlu0
        %v929 = vpop.trf.xlu0
        %v930 = vpop.trf.xlu0
        %v931 = vpop.trf.xlu0
        %v932 = vpop.trf.xlu0
        %v933 = vpop.trf.xlu0
        %v934 = vpop.trf.xlu0
        %v935 = vpop.trf.xlu0
        %v936 = vpop.trf.xlu0
        %v937 = vpop.trf.xlu0
        %v938 = vpop.trf.xlu0
        %v939 = vpop.trf.xlu0
        %v940 = vpop.trf.xlu0
        %v941 = vpop.trf.xlu0
        %v942 = vpop.trf.xlu0
        %v944 = vsel %vm813, %v927, 0
        %v947 = vsel %vm813, %v928, 0
        %v950 = vsel %vm813, %v929, 0
        %v953 = vsel %vm813, %v930, 0
        %955 = vmatprep.subr.mxu0 0.0
        %956 = vmatpush1.msra.mxu0 %v376
        %957 = vmatprep.subr.mxu0 0.0
        %958 = vmatpush1.msra.mxu0 %v378
        %959 = vmatprep.subr.mxu0 0.0
        %960 = vmatpush1.msra.mxu0 0.0
        %961 = vmatprep.subr.mxu0 0.0
        %962 = vmatpush1.msra.mxu0 0.0
        %963 = vmatprep.subr.mxu0 0.0
        %964 = vmatpush1.msra.mxu0 0.0
        %965 = vmatprep.subr.mxu0 0.0
        %966 = vmatpush1.msra.mxu0 0.0
        %967 = vmatprep.subr.mxu0 0.0
        %968 = vmatpush1.msra.mxu0 0.0
        %969 = vmatprep.subr.mxu0 0.0
        %970 = vmatpush1.msra.mxu0 0.0
        %971 = vmatprep.subr.mxu0 0.0
        %972 = vmatpush1.msra.mxu0 0.0
        %973 = vmatprep.subr.mxu0 0.0
        %974 = vmatpush1.msra.mxu0 0.0
        %975 = vmatprep.subr.mxu0 0.0
        %976 = vmatpush1.msra.mxu0 0.0
        %977 = vmatprep.subr.mxu0 0.0
        %978 = vmatpush1.msra.mxu0 0.0
        %979 = vmatprep.subr.mxu0 0.0
        %980 = vmatpush1.msra.mxu0 0.0
        %981 = vmatprep.subr.mxu0 0.0
        %982 = vmatpush1.msra.mxu0 0.0
        %983 = vmatprep.subr.mxu0 0.0
        %984 = vmatpush1.msra.mxu0 0.0
        %985 = vmatprep.subr.mxu0 0.0
        %986 = vmatpush1.msra.mxu0 0.0
        %987 = vmatprep.subr.mxu0 0.0
        %988 = vmatpush1.msra.mxu0 0.0
        %989 = vmatprep.subr.mxu0 0.0
        %990 = vmatpush1.msra.mxu0 0.0
        %991 = vmatprep.subr.mxu0 0.0
        %992 = vmatpush1.msra.mxu0 0.0
        %993 = vmatprep.subr.mxu0 0.0
        %994 = vmatpush1.msra.mxu0 0.0
        %995 = vmatprep.subr.mxu0 0.0
        %996 = vmatpush1.msra.mxu0 0.0
        %997 = vmatprep.subr.mxu0 0.0
        %998 = vmatpush1.msra.mxu0 0.0
        %999 = vmatprep.subr.mxu0 0.0
        %1000 = vmatpush1.msra.mxu0 0.0
        %1001 = vmatprep.subr.mxu0 0.0
        %1002 = vmatpush1.msra.mxu0 0.0
        %1003 = vmatprep.subr.mxu0 0.0
        %1004 = vmatpush1.msra.mxu0 0.0
        %1005 = vmatprep.subr.mxu0 0.0
        %1006 = vmatpush1.msra.mxu0 0.0
        %1007 = vmatprep.subr.mxu0 0.0
        %1008 = vmatpush1.msra.mxu0 0.0
        %1009 = vmatprep.subr.mxu0 0.0
        %1010 = vmatpush1.msra.mxu0 0.0
        %1011 = vmatprep.subr.mxu0 0.0
        %1012 = vmatpush1.msra.mxu0 0.0
        %1013 = vmatprep.subr.mxu0 0.0
        %1014 = vmatpush1.msra.mxu0 0.0
        %1015 = vmatprep.subr.mxu0 0.0
        %1016 = vmatpush1.msra.mxu0 0.0
        %1017 = vmatprep.subr.mxu0 0.0
        %1018 = vmatpush1.msra.mxu0 0.0
        %1019 = vmatprep.mubr.f32.mxu0 0.0
        %1020 = vmatmul.mubr.f32.gmra.mrb[0].mxu0 %v944
        %v1021 = vpop.f32.mrb[0].mxu0
        %v1022 = vadd.f32 0.0, %v1021
        %v1023 = vpop.f32.mrb[0].mxu0
        %1024 = vmatprep.mubr.f32.mxu0 0.0
        %1025 = vmatmul.mubr.f32.gmra.mrb[0].mxu0 %v947
        %v1026 = vpop.f32.mrb[0].mxu0
        %v1027 = vadd.f32 0.0, %v1026
        %v1028 = vpop.f32.mrb[0].mxu0
        %1029 = vmatprep.mubr.f32.mxu0 0.0
        %1030 = vmatmul.mubr.f32.gmra.mrb[0].mxu0 %v950
        %v1031 = vpop.f32.mrb[0].mxu0
        %v1032 = vadd.f32 0.0, %v1031
        %v1033 = vpop.f32.mrb[0].mxu0
        %1034 = vmatprep.mubr.f32.mxu0 0.0
        %1035 = vmatmul.mubr.f32.gmra.mrb[0].mxu0 %v953
        %v1036 = vpop.f32.mrb[0].mxu0
        %v1037 = vadd.f32 0.0, %v1036
        %v1038 = vpop.f32.mrb[0].mxu0
        %1039 = vdwg.mxu0
        %1040 = vst.msk [vmem:[%s358] sm:$0xff] %vm397, %v893
        %1041 = vst.msk [vmem:[%s358 + $0x8] sm:$0xff] %vm397, %v898
        %1042 = vst.msk [vmem:[%s358 + $0x10] sm:$0xff] %vm397, %v903
        %1043 = vst.msk [vmem:[%s358 + $0x18] sm:$0xff] %vm397, %v908
        %1044 = vst.msk [vmem:[%s358 + $0x20] sm:$0xff] %vm397, %v1022
        %1045 = vst.msk [vmem:[%s358 + $0x28] sm:$0xff] %vm397, %v1027
        %1046 = vst.msk [vmem:[%s358 + $0x30] sm:$0xff] %vm397, %v1032
        %1047 = vst.msk [vmem:[%s358 + $0x38] sm:$0xff] %vm397, %v1037
        %s1048 = sand.u32 %s179, 1
        %s1049 = scalar_lea.sflag [#allocation4], %s1048
        %s1050 = sand.u32 %s179, 1
        %s1051 = smul.addr %s1050, 64
        %s1052 = scalar_lea.vmem [#allocation8], %s1051
        // Predicated region
        $region53: #{tpu_custom_call.1} parent=39 // pred_check
          %p1053 = pneg %p189
        $region54: #{tpu_custom_call.1} parent=39 // pred_check_branch
          %1055 = sbr.rel (%p1053) target = $region56
        $region55: #{tpu_custom_call.1} parent=39 // pred_region
          %s1056 = smul.u32 2, %s27
          %s1058 = ssub.s32 1024, 1024
          %1059 = vsyncadd %s1049, %s1058
          %s1060 = smul.addr %s1056, 4
          %s1061 = smul.addr %s28, 8
          %s1062 = sadd.s32 %s1060, %s1061
          %s1063 = smul.addr %s1062, 128
          %s1064 = scalar_lea.hbm %s5, %s1063
          %s1065 = sshll.u32 %s1052, 4
          %s1066 = int_to_ptr.vmem [resolvable:$true] %s1065
          %1071 = dma.vmem_to_hbm [thread:$0]  %s1066, 1024, %s1064, %s1049, 128, 128, 8
        $region56: #{tpu_custom_call.1} parent=39 // pred_fallthru
          _
      $region40: #{tpu_custom_call.1} parent=5 // pred_fallthru
        _
      %p1072 = scmp.le.s32.totalorder 2, %s18
      // Predicated region
      $region57: #{tpu_custom_call.1} parent=5 // pred_check
        %p1073 = pneg %p1072
      $region58: #{tpu_custom_call.1} parent=5 // pred_check_branch
        %1075 = sbr.rel (%p1073) target = $region60
      $region59: #{tpu_custom_call.1} parent=5 // pred_region
        %s1076 = ssub.s32 %s18, 2
        // Predicated region
        $region61: #{tpu_custom_call.1} parent=59 // pred_check
          %p1077 = pneg %p195
        $region62: #{tpu_custom_call.1} parent=59 // pred_check_branch
          %1079 = sbr.rel (%p1077) target = $region64
        $region63: #{tpu_custom_call.1} parent=59 // pred_region
          %s1080 = sand.u32 %s180, 1
          %s1081 = scalar_lea.sflag [#allocation4], %s1080
          %s1082 = sand.u32 %s180, 1
          %s1083 = smul.addr %s1082, 64
          %s1084 = scalar_lea.vmem [#allocation8], %s1083
          %1085 = dma.done %s1081, 1024
        $region64: #{tpu_custom_call.1} parent=59 // pred_fallthru
          _
      $region60: #{tpu_custom_call.1} parent=5 // pred_fallthru
        _
    $region6: #{tpu_custom_call.1} parent=1 // loop_footer
      %s22 = sadd.s32 1, %s18
    $region7: #{tpu_custom_call.1} parent=1 // loop_footer_branch
      %17 = sbr.rel target = $region3
    $region8: #{tpu_custom_call.1} parent=1 // loop_exit
      _
    %1086 = vsyncpa [#allocation3], 1
    %s1087 = scalar_lea.sflag [#allocation3], 1
    %1088 = vsyncpa %s1087, 1
    %1089 = vsyncpa [#allocation6], 1
    %s1090 = scalar_lea.sflag [#allocation6], 1
    %1091 = vsyncpa %s1090, 1
    %1092 = vsyncpa [#allocation4], 1
    %s1093 = scalar_lea.sflag [#allocation4], 1
    %1094 = vsyncpa %s1093, 1

</llo_original>
